<compile_context>
chip_gen: v6e
topology: v6e:2x2x1
jax: 0.10.0
libtpu: 0.0.40
codegen_flags: <defaults>
</compile_context>

<pallas_src>
import functools

import jax
import jax.numpy as jnp
from jax import lax
from jax.experimental import pallas as pl
from jax.experimental.pallas import tpu as pltpu


_ACTIVATIONS = {
    "tanh": jnp.tanh,
    "relu": jax.nn.relu,
    "sigmoid": jax.nn.sigmoid,
}


def _round_up(n, m):
    return ((n + m - 1) // m) * m


def _mlp_kernel(x_ref, w1_ref, b1_ref, w2_ref, b2_ref, w3t_ref, b3_ref, o_ref,
                *, act, lane_chunk):
    """One batch tile.  Layout: features on sublanes, batch on lanes.

    x_ref : (in_size , TB)   compute dtype
    w1    : (h0, in_size)    w2: (h1, h0)    w3t: (h1, out_size)
    b1    : (h0, 1)          b2: (h1, 1)     b3 : (out_size, 1) f32
    o_ref : (out_size, TB)   f32
    """
    in_size, tb = x_ref.shape
    out_size = o_ref.shape[0]
    n_chunks = tb // lane_chunk
    cdt = x_ref.dtype

    # Hoist weight/bias loads out of the chunk loop (VMEM-resident, tiny).
    w1 = w1_ref[...]
    b1 = b1_ref[...]
    w2 = w2_ref[...]
    b2 = b2_ref[...]
    w3t = w3t_ref[...]
    b3 = b3_ref[...].astype(jnp.float32)

    def chunk(c, carry):
        j = pl.multiple_of(c * lane_chunk, lane_chunk)
        x = x_ref[:, pl.ds(j, lane_chunk)]                      # (in, LC)

        # ---- layer 1: tiny K -> VALU broadcast MACs instead of the MXU ----
        if in_size <= 4:
            s1 = w1[:, 0:1] * x[0:1, :]                         # (h0, LC)
            for k in range(1, in_size):
                s1 = s1 + w1[:, k:k + 1] * x[k:k + 1, :]
            h = act(s1 + b1)
        else:
            s1 = jnp.dot(w1, x, preferred_element_type=jnp.float32)
            h = act(s1.astype(cdt) + b1)

        # ---- layer 2: MXU matmul, f32 accumulation ----
        s2 = jnp.dot(w2, h, preferred_element_type=jnp.float32)  # (h1, LC)
        h = act(s2.astype(cdt) + b2)

        # ---- layer 3: out_size == 1 -> VPU multiply + cross-sublane reduce ----
        if out_size == 1:
            y = jnp.sum((w3t * h).astype(jnp.float32), axis=0, keepdims=True) + b3
        else:
            y = lax.dot_general(w3t, h, (((0,), (0,)), ((), ())),
                                preferred_element_type=jnp.float32) + b3

        o_ref[:, pl.ds(j, lane_chunk)] = y.astype(o_ref.dtype)
        return carry

    # Short fixed trip count, fully unrolled for LLO scheduler visibility.
    lax.fori_loop(0, n_chunks, chunk, None, unroll=True)


def _forward_fm(x_fm, params, activation, block_batch, compute_dtype):
    """Feature-major forward: x_fm is (in_size, batch) -> (out_size, batch)."""
    act = _ACTIVATIONS[activation]
    cdt = jnp.dtype(compute_dtype)
    (w1, b1), (w2, b2), (w3, b3) = params
    in_size, batch = x_fm.shape
    h0 = w1.shape[0]
    h1 = w2.shape[0]
    out_size = w3.shape[0]

    # ---- tile-size selection ----
    padded128 = max(128, _round_up(batch, 128))
    tb = min(block_batch, padded128)
    if padded128 >= 256:
        # Guarantee >= 2 grid steps so both v7x TensorCores get work.
        tb = min(tb, max(128, (padded128 // 2) // 128 * 128))
    tb = max(128, tb)
    padded = _round_up(batch, tb)
    n_tiles = padded // tb
    lane_chunk = 512 if tb % 512 == 0 else (256 if tb % 256 == 0 else 128)

    # ---- layout plumbing (no transposes in the feature-major path) ----
    x_p = x_fm.astype(cdt)
    if padded > batch:
        x_p = jnp.pad(x_p, ((0, 0), (0, padded - batch)))
    w1c = w1.astype(cdt)
    w2c = w2.astype(cdt)
    w3t = w3.T.astype(cdt)                       # (h1, out_size)
    b1c = b1.reshape(h0, 1).astype(cdt)
    b2c = b2.reshape(h1, 1).astype(cdt)
    b3c = b3.reshape(out_size, 1).astype(jnp.float32)

    # Weights/biases: constant index_map -> DMA'd once, VMEM-resident.
    resident = lambda a: pl.BlockSpec(a.shape, lambda i: (0, 0))

    bpe = cdt.itemsize
    weight_bytes = bpe * (w1c.size + w2c.size + w3t.size + b1c.size + b2c.size) + 4 * b3c.size
    step_bytes = 2 * (bpe * in_size * tb + 4 * out_size * tb)      # double-buffered x/out
    scratch_bytes = 4 * 4 * (h0 + h1) * lane_chunk                  # fused intermediates
    vmem_limit = int(min(48 * 2**20,
                         max(16 * 2**20, 4 * (weight_bytes + step_bytes + scratch_bytes))))

    flops = 2 * padded * (in_size * h0 + h0 * h1 + h1 * out_size)
    transcendentals = padded * (h0 + h1) if activation in ("tanh", "sigmoid") else 0
    bytes_accessed = bpe * padded * in_size + 4 * padded * out_size + weight_bytes
    cost = pl.CostEstimate(flops=flops, transcendentals=transcendentals,
                           bytes_accessed=bytes_accessed)

    y_fm = pl.pallas_call(
        functools.partial(_mlp_kernel, act=act, lane_chunk=lane_chunk),
        out_shape=jax.ShapeDtypeStruct((out_size, padded), jnp.float32),
        grid_spec=pltpu.PrefetchScalarGridSpec(
            num_scalar_prefetch=0,
            grid=(n_tiles,),
            in_specs=[
                pl.BlockSpec((in_size, tb), lambda i: (0, i)),   # streamed x tile
                resident(w1c), resident(b1c),
                resident(w2c), resident(b2c),
                resident(w3t), resident(b3c),
            ],
            out_specs=pl.BlockSpec((out_size, tb), lambda i: (0, i)),
        ),
        compiler_params=pltpu.CompilerParams(
            dimension_semantics=("parallel",),
            vmem_limit_bytes=vmem_limit),
        cost_estimate=cost,
    )(x_p, w1c, b1c, w2c, b2c, w3t, b3c)

    return y_fm[:, :batch]


@functools.partial(jax.jit,
                   static_argnames=("activation", "block_batch", "compute_dtype"))
def neural_net_forward_fm(x_fm, params, activation="tanh", block_batch=8192,
                          compute_dtype="float32"):
    """Feature-major API: x_fm (in_size, batch) -> (out_size, batch).
    Preferred entry point (no layout transposes at all)."""
    return _forward_fm(x_fm, params, activation, block_batch, compute_dtype)


@functools.partial(jax.jit,
                   static_argnames=("activation", "block_batch", "compute_dtype"))
def neural_net_forward(x, params, activation="tanh", block_batch=8192,
                       compute_dtype="float32"):
    """PyTorch-layout API: x (batch, in_size) -> (batch, out_size).
    The transposes live inside this jit; use neural_net_forward_fm to avoid
    them entirely in a PINN training loop."""
    return _forward_fm(x.T, params, activation, block_batch, compute_dtype).T


def init_params(key, input_size, hidden_sizes, output_size):
    """PyTorch nn.Linear default init: U(-1/sqrt(fan_in), 1/sqrt(fan_in)).
    Weights stored in PyTorch layout (out_features, in_features)."""
    sizes = [input_size] + list(hidden_sizes) + [output_size]
    params = []
    for fan_in, fan_out in zip(sizes[:-1], sizes[1:]):
        key, kw, kb = jax.random.split(key, 3)
        bound = 1.0 / (fan_in ** 0.5)
        w = jax.random.uniform(kw, (fan_out, fan_in), jnp.float32, -bound, bound)
        b = jax.random.uniform(kb, (fan_out,), jnp.float32, -bound, bound)
        params.append((w, b))
    return tuple(params)


def reference_forward(x, params, activation="tanh"):
    act = _ACTIVATIONS[activation]
    (w1, b1), (w2, b2), (w3, b3) = params
    h = act(x @ w1.T + b1)
    h = act(h @ w2.T + b2)
    return h @ w3.T + b3


if __name__ == "__main__":
    # 1-DOF Duffing oscillator surrogate: input = (x, x_dot), output = force.
    input_size, hidden_sizes, output_size = 2, [32, 32], 1

    key = jax.random.PRNGKey(0)
    key, kp = jax.random.split(key)
    params = init_params(kp, input_size, hidden_sizes, output_size)

    ok = True
    # batch=8: single-tile; batch=300: ragged multi-tile (3x128);
    # batch=1024: 2 tiles of 512 -> exercises in-kernel lane chunking.
    for batch in (8, 300, 1024):
        key, kx = jax.random.split(key)
        x = jax.random.normal(kx, (batch, input_size), jnp.float32)
        y_ref = reference_forward(x, params, activation="tanh")

        # f32 path, PyTorch layout.
        y = neural_net_forward(x, params, activation="tanh")
        jax.block_until_ready(y)
        ok = ok and (y.shape == (batch, output_size))
        ok = ok and bool(jnp.allclose(y, y_ref, atol=1e-5, rtol=1e-5))

        # bf16-intermediate path (v6e/v7x optimization), feature-major layout.
        y_fm = neural_net_forward_fm(x.T, params, activation="tanh",
                                     compute_dtype="bfloat16")
        jax.block_until_ready(y_fm)
        ok = ok and (y_fm.shape == (output_size, batch))
        ok = ok and bool(jnp.allclose(y_fm.T, y_ref, atol=5e-2, rtol=5e-2))

    assert ok
    print("KERNEL_OK")
</pallas_src>

<mosaic_0001>
module attributes {stable_mosaic.version = 11 : i64} {
  func.func @_mlp_kernel(%arg0: i32, %arg1: memref<2x128xf32, #tpu.memory_space<vmem>>, %arg2: memref<32x2xf32, #tpu.memory_space<vmem>>, %arg3: memref<32x1xf32, #tpu.memory_space<vmem>>, %arg4: memref<32x32xf32, #tpu.memory_space<vmem>>, %arg5: memref<32x1xf32, #tpu.memory_space<vmem>>, %arg6: memref<32x1xf32, #tpu.memory_space<vmem>>, %arg7: memref<1x1xf32, #tpu.memory_space<vmem>>, %arg8: memref<1x128xf32, #tpu.memory_space<vmem>>) attributes {dimension_semantics = [#tpu.dimension_semantics<parallel>], iteration_bounds = array<i64: 1>, scalar_prefetch = 0 : i64, scratch_operands = 0 : i64, tpu.core_type = #tpu.core_type<tc>, window_params = [{transform_indices = @transform_0, window_bounds = array<i64: 2, 128>}, {pipeline_mode = #tpu.pipeline_mode<synchronous>, transform_indices = @transform_1, window_bounds = array<i64: 32, 2>}, {pipeline_mode = #tpu.pipeline_mode<synchronous>, transform_indices = @transform_2, window_bounds = array<i64: 32, 1>}, {pipeline_mode = #tpu.pipeline_mode<synchronous>, transform_indices = @transform_3, window_bounds = array<i64: 32, 32>}, {pipeline_mode = #tpu.pipeline_mode<synchronous>, transform_indices = @transform_4, window_bounds = array<i64: 32, 1>}, {pipeline_mode = #tpu.pipeline_mode<synchronous>, transform_indices = @transform_5, window_bounds = array<i64: 32, 1>}, {pipeline_mode = #tpu.pipeline_mode<synchronous>, transform_indices = @transform_6, window_bounds = array<i64: 1, 1>}, {transform_indices = @transform_7, window_bounds = array<i64: 1, 128>}]} {
    %c0 = arith.constant 0 : index
    %c0_0 = arith.constant 0 : index
    %0 = vector.load %arg2[%c0, %c0_0] : memref<32x2xf32, #tpu.memory_space<vmem>>, vector<32x2xf32>
    %c0_1 = arith.constant 0 : index
    %c0_2 = arith.constant 0 : index
    %1 = vector.load %arg3[%c0_1, %c0_2] : memref<32x1xf32, #tpu.memory_space<vmem>>, vector<32x1xf32>
    %c0_3 = arith.constant 0 : index
    %c0_4 = arith.constant 0 : index
    %2 = vector.load %arg4[%c0_3, %c0_4] : memref<32x32xf32, #tpu.memory_space<vmem>>, vector<32x32xf32>
    %c0_5 = arith.constant 0 : index
    %c0_6 = arith.constant 0 : index
    %3 = vector.load %arg5[%c0_5, %c0_6] : memref<32x1xf32, #tpu.memory_space<vmem>>, vector<32x1xf32>
    %c0_7 = arith.constant 0 : index
    %c0_8 = arith.constant 0 : index
    %4 = vector.load %arg6[%c0_7, %c0_8] : memref<32x1xf32, #tpu.memory_space<vmem>>, vector<32x1xf32>
    %c0_9 = arith.constant 0 : index
    %c0_10 = arith.constant 0 : index
    %5 = vector.load %arg7[%c0_9, %c0_10] : memref<1x1xf32, #tpu.memory_space<vmem>>, vector<1x1xf32>
    %c0_i32 = arith.constant 0 : i32
    %c128_i32 = arith.constant 128 : i32
    %6 = arith.muli %c0_i32, %c128_i32 : i32
    %7 = tpu.assume_multiple %6, 128 : i32
    %c0_11 = arith.constant 0 : index
    %8 = arith.index_cast %7 : i32 to index
    %9 = vector.load %arg1[%c0_11, %8] : memref<2x128xf32, #tpu.memory_space<vmem>>, vector<2x128xf32>
    %10 = vector.extract_strided_slice %0 {offsets = [0, 0], sizes = [32, 1], strides = [1, 1]} : vector<32x2xf32> to vector<32x1xf32>
    %11 = vector.extract_strided_slice %9 {offsets = [0, 0], sizes = [1, 128], strides = [1, 1]} : vector<2x128xf32> to vector<1x128xf32>
    %12 = vector.broadcast %10 : vector<32x1xf32> to vector<32x128xf32>
    %13 = vector.broadcast %11 : vector<1x128xf32> to vector<32x128xf32>
    %14 = arith.mulf %12, %13 : vector<32x128xf32>
    %15 = vector.extract_strided_slice %0 {offsets = [0, 1], sizes = [32, 1], strides = [1, 1]} : vector<32x2xf32> to vector<32x1xf32>
    %16 = vector.extract_strided_slice %9 {offsets = [1, 0], sizes = [1, 128], strides = [1, 1]} : vector<2x128xf32> to vector<1x128xf32>
    %17 = vector.broadcast %15 : vector<32x1xf32> to vector<32x128xf32>
    %18 = vector.broadcast %16 : vector<1x128xf32> to vector<32x128xf32>
    %19 = arith.mulf %17, %18 : vector<32x128xf32>
    %20 = arith.addf %14, %19 : vector<32x128xf32>
    %21 = vector.broadcast %1 : vector<32x1xf32> to vector<32x128xf32>
    %22 = arith.addf %20, %21 : vector<32x128xf32>
    %23 = math.tanh %22 : vector<32x128xf32>
    %cst = arith.constant dense<0.000000e+00> : vector<32x128xf32>
    %24 = tpu.matmul %2, %23, %cst {dimension_numbers = #tpu.dot_dimension_numbers<[1], [0], [0], [1], [0, 0, 1, 1], [], []>} : vector<32x32xf32>, vector<32x128xf32>, vector<32x128xf32> -> vector<32x128xf32>
    %25 = vector.broadcast %3 : vector<32x1xf32> to vector<32x128xf32>
    %26 = arith.addf %24, %25 : vector<32x128xf32>
    %27 = math.tanh %26 : vector<32x128xf32>
    %28 = vector.broadcast %4 : vector<32x1xf32> to vector<32x128xf32>
    %29 = arith.mulf %28, %27 : vector<32x128xf32>
    %cst_12 = arith.constant dense<0.000000e+00> : vector<128xf32>
    %30 = vector.multi_reduction <add>, %29, %cst_12 [0] : vector<32x128xf32> to vector<128xf32>
    %31 = vector.shape_cast %30 : vector<128xf32> to vector<1x128xf32>
    %32 = vector.broadcast %5 : vector<1x1xf32> to vector<1x128xf32>
    %33 = arith.addf %31, %32 : vector<1x128xf32>
    %c0_13 = arith.constant 0 : index
    %34 = arith.index_cast %7 : i32 to index
    %35 = vector.load %arg8[%c0_13, %34] : memref<1x128xf32, #tpu.memory_space<vmem>>, vector<1x128xf32>
    tpu.vector_store %arg8[%c0_13, %34], %33 {strides = array<i32>} : memref<1x128xf32, #tpu.memory_space<vmem>>, vector<1x128xf32>,
    %c1_i32 = arith.constant 1 : i32
    return
  }
  func.func @transform_0(%arg0: i32) -> (i32, i32) {
    %c0_i32 = arith.constant 0 : i32
    %c0_i32_0 = arith.constant 0 : i32
    return %c0_i32, %arg0 : i32, i32
  }
  func.func @transform_1(%arg0: i32) -> (i32, i32) {
    %c0_i32 = arith.constant 0 : i32
    %c0_i32_0 = arith.constant 0 : i32
    %c0_i32_1 = arith.constant 0 : i32
    return %c0_i32, %c0_i32_0 : i32, i32
  }
  func.func @transform_2(%arg0: i32) -> (i32, i32) {
    %c0_i32 = arith.constant 0 : i32
    %c0_i32_0 = arith.constant 0 : i32
    %c0_i32_1 = arith.constant 0 : i32
    return %c0_i32, %c0_i32_0 : i32, i32
  }
  func.func @transform_3(%arg0: i32) -> (i32, i32) {
    %c0_i32 = arith.constant 0 : i32
    %c0_i32_0 = arith.constant 0 : i32
    %c0_i32_1 = arith.constant 0 : i32
    return %c0_i32, %c0_i32_0 : i32, i32
  }
  func.func @transform_4(%arg0: i32) -> (i32, i32) {
    %c0_i32 = arith.constant 0 : i32
    %c0_i32_0 = arith.constant 0 : i32
    %c0_i32_1 = arith.constant 0 : i32
    return %c0_i32, %c0_i32_0 : i32, i32
  }
  func.func @transform_5(%arg0: i32) -> (i32, i32) {
    %c0_i32 = arith.constant 0 : i32
    %c0_i32_0 = arith.constant 0 : i32
    %c0_i32_1 = arith.constant 0 : i32
    return %c0_i32, %c0_i32_0 : i32, i32
  }
  func.func @transform_6(%arg0: i32) -> (i32, i32) {
    %c0_i32 = arith.constant 0 : i32
    %c0_i32_0 = arith.constant 0 : i32
    %c0_i32_1 = arith.constant 0 : i32
    return %c0_i32, %c0_i32_0 : i32, i32
  }
  func.func @transform_7(%arg0: i32) -> (i32, i32) {
    %c0_i32 = arith.constant 0 : i32
    %c0_i32_0 = arith.constant 0 : i32
    return %c0_i32, %arg0 : i32, i32
  }
}

</mosaic_0001>

<llo_original>
// kernel: neural_net_forward.1
$region0: #{neural_net_forward.1}
  #allocation0 [shape = 'u32[]', space=smem, size = 0x4, offset = 0x4, fixed_abs, tag = 'smem constant byte address 0x4 - core index']
  #allocation1 [shape = 'u32[144,128]{1,0:T(1,128)}', space=vmem, size = 0x12000, scoped, tag = 'internal scratch']
  #allocation2 [shape = 'f32[1,1]{1,0:T(1,128)S(1)}', space=vmem, size = 0x200, scoped, tag = 'scoped memory for neural_net_forward.1']
  %s0 = inlined_call_operand.vmem [shape: f32[2,128], index: 0, kind: input, shape index: {}]
  %s1 = inlined_call_operand.vmem [shape: f32[32,2], index: 1, kind: input, shape index: {}]
  %s2 = inlined_call_operand.vmem [shape: f32[32,1], index: 2, kind: input, shape index: {}]
  %s3 = inlined_call_operand.vmem [shape: f32[32,32], index: 3, kind: input, shape index: {}]
  %s4 = inlined_call_operand.vmem [shape: f32[32,1], index: 4, kind: input, shape index: {}]
  %s5 = inlined_call_operand.vmem [shape: f32[32,1], index: 5, kind: input, shape index: {}]
  %s6 = inlined_call_operand.<no memory space> [shape: f32[1,1], index: 6, kind: input, shape index: {}]
  %s7 = inlined_call_operand.vmem [shape: f32[1,128], index: 7, kind: output, shape index: {}]
  %s8 = sld [smem:[#allocation0]]
  $region38: #{neural_net_forward.1} parent=0
    _
  %s10 = ssub.s32 1, %s8
  %s11 = scalar_select 0, %s10, %s8
  %v12 = vstv %s6
  %13 = vst [vmem:[#allocation2] sm:$0x1] %v12
  // Predicated region
  $region2: #{neural_net_forward.1} parent=0 // pred_check
    _
  $region3: #{neural_net_forward.1} parent=0 // pred_check_branch
    %15 = sbr.rel (0) target = $region5
  $region4: #{neural_net_forward.1} parent=0 // pred_region
    _
  $region5: #{neural_net_forward.1} parent=0 // pred_fallthru
    _
  // Predicated region
  $region6: #{neural_net_forward.1} parent=0 // pred_check
    _
  $region7: #{neural_net_forward.1} parent=0 // pred_check_branch
    %17 = sbr.rel (0) target = $region9
  $region8: #{neural_net_forward.1} parent=0 // pred_region
    _
  $region9: #{neural_net_forward.1} parent=0 // pred_fallthru
    _
  // Predicated region
  $region10: #{neural_net_forward.1} parent=0 // pred_check
    _
  $region11: #{neural_net_forward.1} parent=0 // pred_check_branch
    %19 = sbr.rel (0) target = $region13
  $region12: #{neural_net_forward.1} parent=0 // pred_region
    _
  $region13: #{neural_net_forward.1} parent=0 // pred_fallthru
    _
  // Predicated region
  $region14: #{neural_net_forward.1} parent=0 // pred_check
    _
  $region15: #{neural_net_forward.1} parent=0 // pred_check_branch
    %21 = sbr.rel (0) target = $region17
  $region16: #{neural_net_forward.1} parent=0 // pred_region
    _
  $region17: #{neural_net_forward.1} parent=0 // pred_fallthru
    _
  // Predicated region
  $region18: #{neural_net_forward.1} parent=0 // pred_check
    _
  $region19: #{neural_net_forward.1} parent=0 // pred_check_branch
    %23 = sbr.rel (0) target = $region21
  $region20: #{neural_net_forward.1} parent=0 // pred_region
    _
  $region21: #{neural_net_forward.1} parent=0 // pred_fallthru
    _
  // Predicated region
  $region22: #{neural_net_forward.1} parent=0 // pred_check
    _
  $region23: #{neural_net_forward.1} parent=0 // pred_check_branch
    %25 = sbr.rel (0) target = $region25
  $region24: #{neural_net_forward.1} parent=0 // pred_region
    _
  $region25: #{neural_net_forward.1} parent=0 // pred_fallthru
    _
  // Predicated region
  $region26: #{neural_net_forward.1} parent=0 // pred_check
    _
  $region27: #{neural_net_forward.1} parent=0 // pred_check_branch
    %27 = sbr.rel (0) target = $region29
  $region28: #{neural_net_forward.1} parent=0 // pred_region
    _
  $region29: #{neural_net_forward.1} parent=0 // pred_fallthru
    _
  %v28 = vld [vmem:[%s1] sm:$0xff]
  %v29 = vld [vmem:[%s1 + $0x8] sm:$0xff]
  %v30 = vld [vmem:[%s1 + $0x10] sm:$0xff]
  %v31 = vld [vmem:[%s1 + $0x18] sm:$0xff]
  %v32 = vld [vmem:[%s2] sm:$0xff]
  %v33 = vld [vmem:[%s2 + $0x8] sm:$0xff]
  %v34 = vld [vmem:[%s2 + $0x10] sm:$0xff]
  %v35 = vld [vmem:[%s2 + $0x18] sm:$0xff]
  %v36 = vld [vmem:[%s3] sm:$0xff]
  %v37 = vld [vmem:[%s3 + $0x8] sm:$0xff]
  %v38 = vld [vmem:[%s3 + $0x10] sm:$0xff]
  %v39 = vld [vmem:[%s3 + $0x18] sm:$0xff]
  %v40 = vld [vmem:[%s4] sm:$0xff]
  %v41 = vld [vmem:[%s4 + $0x8] sm:$0xff]
  %v42 = vld [vmem:[%s4 + $0x10] sm:$0xff]
  %v43 = vld [vmem:[%s4 + $0x18] sm:$0xff]
  %v44 = vld [vmem:[%s5] sm:$0xff]
  %v45 = vld [vmem:[%s5 + $0x8] sm:$0xff]
  %v46 = vld [vmem:[%s5 + $0x10] sm:$0xff]
  %v47 = vld [vmem:[%s5 + $0x18] sm:$0xff]
  %v48 = vld [vmem:[#allocation2] sm:$0x1]
  %v49 = vld [vmem:[%s0] sm:$0x3]
  %51 = vset.pattern.permute.xlu0 0
  %52 = vperm.xlu0 %51, %v28
  %v53 = vpop.permute.xlu0 %52
  %56 = vset.pattern.permute.xlu0 0
  %57 = vperm.xlu0 %56, %v29
  %v58 = vpop.permute.xlu0 %57
  %61 = vset.pattern.permute.xlu0 0
  %62 = vperm.xlu0 %61, %v30
  %v63 = vpop.permute.xlu0 %62
  %66 = vset.pattern.permute.xlu0 0
  %67 = vperm.xlu0 %66, %v31
  %v68 = vpop.permute.xlu0 %67
  %v70 = vlaneseq
  %v71 = vshrl.u32 %v70, 7
  %v72 = vsub.s32 0, %v71
  %v73 = vrot.slane %v49, %v72
  %v74 = vmul.f32 %v53, %v73
  %v75 = vmul.f32 %v58, %v73
  %v76 = vmul.f32 %v63, %v73
  %v77 = vmul.f32 %v68, %v73
  %78 = vset.pattern.permute.xlu0 1
  %79 = vperm.xlu0 %78, %v28
  %v80 = vpop.permute.xlu0 %79
  %82 = vset.pattern.permute.xlu0 1
  %83 = vperm.xlu0 %82, %v29
  %v84 = vpop.permute.xlu0 %83
  %86 = vset.pattern.permute.xlu0 1
  %87 = vperm.xlu0 %86, %v30
  %v88 = vpop.permute.xlu0 %87
  %90 = vset.pattern.permute.xlu0 1
  %91 = vperm.xlu0 %90, %v31
  %v92 = vpop.permute.xlu0 %91
  %v94 = vlaneseq
  %v95 = vshrl.u32 %v94, 7
  %v96 = vsub.s32 1, %v95
  %v97 = vrot.slane %v49, %v96
  %v98 = vmul.f32 %v80, %v97
  %v99 = vmul.f32 %v84, %v97
  %v100 = vmul.f32 %v88, %v97
  %v101 = vmul.f32 %v92, %v97
  %v102 = vadd.f32 %v74, %v98
  %v103 = vadd.f32 %v75, %v99
  %v104 = vadd.f32 %v76, %v100
  %v105 = vadd.f32 %v77, %v101
  %107 = vset.pattern.permute.xlu0 0
  %108 = vperm.xlu0 %107, %v32
  %v109 = vpop.permute.xlu0 %108
  %112 = vset.pattern.permute.xlu0 0
  %113 = vperm.xlu0 %112, %v33
  %v114 = vpop.permute.xlu0 %113
  %117 = vset.pattern.permute.xlu0 0
  %118 = vperm.xlu0 %117, %v34
  %v119 = vpop.permute.xlu0 %118
  %122 = vset.pattern.permute.xlu0 0
  %123 = vperm.xlu0 %122, %v35
  %v124 = vpop.permute.xlu0 %123
  %v126 = vadd.f32 %v102, %v109
  %v127 = vadd.f32 %v103, %v114
  %v128 = vadd.f32 %v104, %v119
  %v129 = vadd.f32 %v105, %v124
  %v130 = vtanh.pop %v126
  %v131 = vtanh.pop %v127
  %v132 = vtanh.pop %v128
  %v133 = vtanh.pop %v129
  %135 = vset.pattern.permute.xlu0 0
  %136 = vperm.xlu0 %135, %v40
  %v137 = vpop.permute.xlu0 %136
  %140 = vset.pattern.permute.xlu0 0
  %141 = vperm.xlu0 %140, %v41
  %v142 = vpop.permute.xlu0 %141
  %145 = vset.pattern.permute.xlu0 0
  %146 = vperm.xlu0 %145, %v42
  %v147 = vpop.permute.xlu0 %146
  %150 = vset.pattern.permute.xlu0 0
  %151 = vperm.xlu0 %150, %v43
  %v152 = vpop.permute.xlu0 %151
  %vm154 = vcmask 261120
  %v156 = vsel %vm154, %v36, 0
  %v159 = vsel %vm154, %v37, 0
  %v162 = vsel %vm154, %v38, 0
  %v165 = vsel %vm154, %v39, 0
  %167 = vmatprep.subr.mxu0 0.0
  %168 = vmatpush1.msra.mxu0 0.0
  %169 = vmatprep.subr.mxu0 0.0
  %170 = vmatpush1.msra.mxu0 0.0
  %171 = vmatprep.subr.mxu0 0.0
  %172 = vmatpush1.msra.mxu0 0.0
  %173 = vmatprep.subr.mxu0 0.0
  %174 = vmatpush1.msra.mxu0 0.0
  %175 = vmatprep.subr.mxu0 0.0
  %176 = vmatpush1.msra.mxu0 0.0
  %177 = vmatprep.subr.mxu0 0.0
  %178 = vmatpush1.msra.mxu0 0.0
  %179 = vmatprep.subr.mxu0 0.0
  %180 = vmatpush1.msra.mxu0 0.0
  %181 = vmatprep.subr.mxu0 0.0
  %182 = vmatpush1.msra.mxu0 0.0
  %183 = vmatprep.subr.mxu0 0.0
  %184 = vmatpush1.msra.mxu0 0.0
  %185 = vmatprep.subr.mxu0 0.0
  %186 = vmatpush1.msra.mxu0 0.0
  %187 = vmatprep.subr.mxu0 0.0
  %188 = vmatpush1.msra.mxu0 0.0
  %189 = vmatprep.subr.mxu0 0.0
  %190 = vmatpush1.msra.mxu0 0.0
  %191 = vmatprep.subr.mxu0 0.0
  %192 = vmatpush1.msra.mxu0 %v133
  %193 = vmatprep.subr.mxu0 0.0
  %194 = vmatpush1.msra.mxu0 %v132
  %195 = vmatprep.subr.mxu0 0.0
  %196 = vmatpush1.msra.mxu0 %v131
  %197 = vmatprep.subr.mxu0 0.0
  %198 = vmatpush1.msra.mxu0 %v130
  %199 = vmatprep.subr.mxu0 0.0
  %200 = vmatpush2.msra.mxu0 0.0
  %201 = vmatprep.subr.mxu0 0.0
  %202 = vmatpush2.msra.mxu0 0.0
  %203 = vmatprep.subr.mxu0 0.0
  %204 = vmatpush2.msra.mxu0 0.0
  %205 = vmatprep.subr.mxu0 0.0
  %206 = vmatpush2.msra.mxu0 0.0
  %207 = vmatprep.subr.mxu0 0.0
  %208 = vmatpush2.msra.mxu0 0.0
  %209 = vmatprep.subr.mxu0 0.0
  %210 = vmatpush2.msra.mxu0 0.0
  %211 = vmatprep.subr.mxu0 0.0
  %212 = vmatpush2.msra.mxu0 0.0
  %213 = vmatprep.subr.mxu0 0.0
  %214 = vmatpush2.msra.mxu0 0.0
  %215 = vmatprep.subr.mxu0 0.0
  %216 = vmatpush2.msra.mxu0 0.0
  %217 = vmatprep.subr.mxu0 0.0
  %218 = vmatpush2.msra.mxu0 0.0
  %219 = vmatprep.subr.mxu0 0.0
  %220 = vmatpush2.msra.mxu0 0.0
  %221 = vmatprep.subr.mxu0 0.0
  %222 = vmatpush2.msra.mxu0 0.0
  %223 = vmatprep.subr.mxu0 0.0
  %224 = vmatpush2.msra.mxu0 0.0
  %225 = vmatprep.subr.mxu0 0.0
  %226 = vmatpush2.msra.mxu0 0.0
  %227 = vmatprep.subr.mxu0 0.0
  %228 = vmatpush2.msra.mxu0 0.0
  %229 = vmatprep.subr.mxu0 0.0
  %230 = vmatpush2.msra.mxu0 0.0
  %231 = vmatprep.mubr.f32.mxu0 0.0
  %232 = vmatmul.mubr.f32.gmra.mxu0 %v156
  %v233 = vpop.f32.mrf.mxu0
  %v234 = vadd.f32 %v137, %v233
  %v235 = vpop.f32.mrf.mxu0
  %236 = vmatprep.mubr.f32.mxu0 0.0
  %237 = vmatmul.mubr.f32.gmra.mxu0 %v159
  %v238 = vpop.f32.mrf.mxu0
  %v239 = vadd.f32 %v142, %v238
  %v240 = vpop.f32.mrf.mxu0
  %241 = vmatprep.mubr.f32.mxu0 0.0
  %242 = vmatmul.mubr.f32.gmra.mxu0 %v162
  %v243 = vpop.f32.mrf.mxu0
  %v244 = vadd.f32 %v147, %v243
  %v245 = vpop.f32.mrf.mxu0
  %246 = vmatprep.mubr.f32.mxu0 0.0
  %247 = vmatmul.mubr.f32.gmra.mxu0 %v165
  %v248 = vpop.f32.mrf.mxu0
  %v249 = vadd.f32 %v152, %v248
  %v250 = vpop.f32.mrf.mxu0
  %251 = vdwg.mxu0
  %v252 = vtanh.pop %v234
  %v253 = vtanh.pop %v239
  %v254 = vtanh.pop %v244
  %v255 = vtanh.pop %v249
  %257 = vset.pattern.permute.xlu0 0
  %258 = vperm.xlu0 %257, %v44
  %v259 = vpop.permute.xlu0 %258
  %262 = vset.pattern.permute.xlu0 0
  %263 = vperm.xlu0 %262, %v45
  %v264 = vpop.permute.xlu0 %263
  %267 = vset.pattern.permute.xlu0 0
  %268 = vperm.xlu0 %267, %v46
  %v269 = vpop.permute.xlu0 %268
  %272 = vset.pattern.permute.xlu0 0
  %273 = vperm.xlu0 %272, %v47
  %v274 = vpop.permute.xlu0 %273
  %v276 = vmul.f32 %v259, %v252
  %v277 = vmul.f32 %v264, %v253
  %v278 = vmul.f32 %v269, %v254
  %v279 = vmul.f32 %v274, %v255
  %v280 = vadd.f32 %v276, %v277
  %v281 = vadd.f32 %v280, %v278
  %v282 = vadd.f32 %v281, %v279
  %v283 = vrot.slane %v282, 4
  %v284 = vadd.f32 %v282, %v283
  %v285 = vrot.slane %v284, 2
  %v286 = vadd.f32 %v284, %v285
  %v287 = vrot.slane %v286, 1
  %v288 = vadd.f32 %v286, %v287
  %290 = vset.pattern.permute.xlu0 0
  %291 = vperm.xlu0 %290, %v48
  %v292 = vpop.permute.xlu0 %291
  %v294 = vlaneseq
  %v295 = vshrl.u32 %v294, 7
  %v296 = vsub.s32 0, %v295
  %v297 = vrot.slane %v292, %v296
  %v298 = vadd.f32 %v288, %v297
  %299 = vst [vmem:[%s7] sm:$0x1] %v298
  // Predicated region
  $region30: #{neural_net_forward.1} parent=0 // pred_check
    _
  $region31: #{neural_net_forward.1} parent=0 // pred_check_branch
    %301 = sbr.rel (0) target = $region33
  $region32: #{neural_net_forward.1} parent=0 // pred_region
    _
  $region33: #{neural_net_forward.1} parent=0 // pred_fallthru
    _
  // Predicated region
  $region34: #{neural_net_forward.1} parent=0 // pred_check
    _
  $region35: #{neural_net_forward.1} parent=0 // pred_check_branch
    %303 = sbr.rel (0) target = $region37
  $region36: #{neural_net_forward.1} parent=0 // pred_region
    _
  $region37: #{neural_net_forward.1} parent=0 // pred_fallthru
    _

</llo_original>
